<compile_context>
chip_gen: v7x
topology: tpu7x:2x2x1
jax: 0.10.0
libtpu: 0.0.40
codegen_flags: <defaults>
</compile_context>

<pallas_src>
import functools

import jax
import jax.numpy as jnp
from jax import lax
from jax.experimental import pallas as pl
from jax.experimental.pallas import tpu as pltpu


def _round_up(n, m):
    return ((n + m - 1) // m) * m


# ----------------------------------------------------------------------------
# Kernel 1: batched input projection   y = x @ W_ih^T + (b_ih + b_hh)
#   x2d : (N, D)    rows are flattened (time, batch) pairs
#   w   : (D, 4H)   pre-transposed in the wrapper
#   b   : (1, 4H)
# Output last dim is 4H (lane-dense, e.g. 128 for H=32).
# ----------------------------------------------------------------------------
def _in_proj_kernel(x_ref, w_ref, b_ref, o_ref):
    o_ref[...] = (
        jnp.dot(x_ref[...], w_ref[...], preferred_element_type=jnp.float32)
        + b_ref[...]
    ).astype(o_ref.dtype)


def _input_projection(x2d, w_ihT, bias, *, row_tile):
    n, d = x2d.shape
    g4h = w_ihT.shape[1]
    n_pad = _round_up(n, row_tile)
    if n_pad != n:  # pad rows instead of asserting divisibility
        x2d = jnp.pad(x2d, ((0, n_pad - n), (0, 0)))

    out = pl.pallas_call(
        _in_proj_kernel,
        out_shape=jax.ShapeDtypeStruct((n_pad, g4h), jnp.float32),
        grid_spec=pltpu.PrefetchScalarGridSpec(
            num_scalar_prefetch=0,
            grid=(n_pad // row_tile,),
            in_specs=[
                pl.BlockSpec((row_tile, d), lambda i: (i, 0)),   # x row tile
                pl.BlockSpec((d, g4h), lambda i: (0, 0)),        # W_ih^T (resident)
                pl.BlockSpec((1, g4h), lambda i: (0, 0)),        # fused bias (resident)
            ],
            out_specs=pl.BlockSpec((row_tile, g4h), lambda i: (i, 0)),
        ),
        compiler_params=pltpu.CompilerParams(dimension_semantics=("parallel",)),
    )(x2d, w_ihT, bias)
    return out[:n]


# ----------------------------------------------------------------------------
# Kernel 2: LSTM recurrence over one layer.
#   xproj : (T_pad, B, 4H)  precomputed input projection (time-major)
#   w_hhT : (H, 4H)         pre-transposed recurrent weights (resident)
#   out   : (T_pad, B, H)
# Grid iterates sequentially over time chunks; h/c persist in VMEM scratch.
# PyTorch gate order: i, f, g, o.
# ----------------------------------------------------------------------------
def _lstm_recurrence_kernel(xproj_ref, whhT_ref, out_ref, h_ref, c_ref, *,
                            hidden, time_chunk):
    @pl.when(pl.program_id(0) == 0)
    def _():
        h_ref[...] = jnp.zeros_like(h_ref)
        c_ref[...] = jnp.zeros_like(c_ref)

    w_hhT = whhT_ref[...]  # hoist the resident weight load out of the loop

    def step(t, carry):
        h, c = carry
        gates = xproj_ref[t] + jnp.dot(h, w_hhT,
                                       preferred_element_type=jnp.float32)  # (B, 4H)
        i = jax.nn.sigmoid(gates[:, 0 * hidden:1 * hidden])
        f = jax.nn.sigmoid(gates[:, 1 * hidden:2 * hidden])
        g = jnp.tanh(gates[:, 2 * hidden:3 * hidden])
        o = jax.nn.sigmoid(gates[:, 3 * hidden:4 * hidden])
        c = f * c + i * g
        h = o * jnp.tanh(c)
        out_ref[t] = h.astype(out_ref.dtype)
        return (h, c)

    h, c = lax.fori_loop(0, time_chunk, step, (h_ref[...], c_ref[...]),
                         unroll=(time_chunk <= 16))
    h_ref[...] = h
    c_ref[...] = c


def _lstm_layer(seq_tbD, w_ihT, w_hhT, bias, *, time_chunk, row_tile):
    t_pad, b, d = seq_tbD.shape
    hidden = w_hhT.shape[0]

    xproj2d = _input_projection(seq_tbD.reshape(t_pad * b, d), w_ihT, bias,
                                row_tile=row_tile)
    xproj = xproj2d.reshape(t_pad, b, 4 * hidden)

    out = pl.pallas_call(
        functools.partial(_lstm_recurrence_kernel,
                          hidden=hidden, time_chunk=time_chunk),
        out_shape=jax.ShapeDtypeStruct((t_pad, b, hidden), jnp.float32),
        grid_spec=pltpu.PrefetchScalarGridSpec(
            num_scalar_prefetch=0,
            grid=(t_pad // time_chunk,),
            in_specs=[
                pl.BlockSpec((time_chunk, b, 4 * hidden), lambda i: (i, 0, 0)),
                pl.BlockSpec((hidden, 4 * hidden), lambda i: (0, 0)),  # resident
            ],
            out_specs=pl.BlockSpec((time_chunk, b, hidden), lambda i: (i, 0, 0)),
            scratch_shapes=[
                pltpu.VMEM((b, hidden), jnp.float32),   # h state
                pltpu.VMEM((b, hidden), jnp.float32),   # c state
            ],
        ),
        # Recurrence is inherently sequential -> "arbitrary".
        compiler_params=pltpu.CompilerParams(dimension_semantics=("arbitrary",)),
    )(xproj, w_hhT)
    return out


def lstm_uni_forward(x, params, *, time_chunk=8, row_tile=512):
    """Forward of LSTM_uni.

    x      : (B, T, D) float32, batch_first (like the PyTorch module).
    params : list over layers of (w_ih (4H, D_l), w_hh (4H, H), b_ih (4H,), b_hh (4H,))
             in PyTorch nn.LSTM layout / gate order (i, f, g, o).
    Returns r_out of shape (B, T, H); (h0, c0) are zeros (PyTorch `None`).
    """
    B, T, _ = x.shape
    t_pad = _round_up(T, time_chunk)
    seq = jnp.transpose(x, (1, 0, 2)).astype(jnp.float32)          # (T, B, D)
    if t_pad != T:  # zero-padded timesteps come after all real ones -> harmless
        seq = jnp.pad(seq, ((0, t_pad - T), (0, 0), (0, 0)))

    for (w_ih, w_hh, b_ih, b_hh) in params:
        w_ihT = jnp.transpose(w_ih).astype(jnp.float32)            # (D_l, 4H)
        w_hhT = jnp.transpose(w_hh).astype(jnp.float32)            # (H, 4H)
        bias = (b_ih + b_hh).astype(jnp.float32).reshape(1, -1)    # (1, 4H)
        n = t_pad * B
        rt = row_tile if n >= row_tile else _round_up(n, 8)
        seq = _lstm_layer(seq, w_ihT, w_hhT, bias,
                          time_chunk=time_chunk, row_tile=rt)

    return jnp.transpose(seq[:T], (1, 0, 2))                       # (B, T, H)


# ----------------------------------------------------------------------------
# Pure-JAX reference (lax.scan LSTM) for correctness checking.
# ----------------------------------------------------------------------------
def _reference_lstm(x, params):
    B = x.shape[0]
    seq = x.astype(jnp.float32)                                    # (B, T, D)
    for (w_ih, w_hh, b_ih, b_hh) in params:
        H = w_hh.shape[1]

        def step(carry, x_t, w_ih=w_ih, w_hh=w_hh, b_ih=b_ih, b_hh=b_hh):
            h, c = carry
            gates = x_t @ w_ih.T + b_ih + h @ w_hh.T + b_hh
            i, f, g, o = jnp.split(gates, 4, axis=-1)
            c = jax.nn.sigmoid(f) * c + jax.nn.sigmoid(i) * jnp.tanh(g)
            h = jax.nn.sigmoid(o) * jnp.tanh(c)
            return (h, c), h

        h0 = jnp.zeros((B, H), jnp.float32)
        c0 = jnp.zeros((B, H), jnp.float32)
        (_, _), ys = lax.scan(step, (h0, c0), jnp.transpose(seq, (1, 0, 2)))
        seq = jnp.transpose(ys, (1, 0, 2))
    return seq


if __name__ == "__main__":
    # input_size = 32, hidden_size = 32, num_layers = 2, batch = 2, seq = 8
    B, T, D, H, L = 2, 8, 32, 32, 2
    key = jax.random.PRNGKey(0)
    kx, key = jax.random.split(key)
    x = jax.random.normal(kx, (B, T, D), dtype=jnp.float32)

    # Deterministic PyTorch-style nn.LSTM parameters: U(-1/sqrt(H), 1/sqrt(H)).
    bound = 1.0 / jnp.sqrt(jnp.float32(H))
    params = []
    in_dim = D
    for _ in range(L):
        key, k1, k2, k3, k4 = jax.random.split(key, 5)
        w_ih = jax.random.uniform(k1, (4 * H, in_dim), jnp.float32, -bound, bound)
        w_hh = jax.random.uniform(k2, (4 * H, H), jnp.float32, -bound, bound)
        b_ih = jax.random.uniform(k3, (4 * H,), jnp.float32, -bound, bound)
        b_hh = jax.random.uniform(k4, (4 * H,), jnp.float32, -bound, bound)
        params.append((w_ih, w_hh, b_ih, b_hh))
        in_dim = H

    out = lstm_uni_forward(x, params)
    out = jax.block_until_ready(out)

    ref = _reference_lstm(x, params)
    assert out.shape == (B, T, H)
    err = float(jnp.max(jnp.abs(out - ref)))
    assert jnp.allclose(out, ref, atol=1e-4, rtol=1e-4), err

    print("KERNEL_OK")
</pallas_src>

<mosaic_0001>
module attributes {stable_mosaic.version = 11 : i64} {
  func.func @_in_proj_kernel(%arg0: i32, %arg1: memref<16x32xf32, #tpu.memory_space<vmem>>, %arg2: memref<32x128xf32, #tpu.memory_space<vmem>>, %arg3: memref<1x128xf32, #tpu.memory_space<vmem>>, %arg4: memref<16x128xf32, #tpu.memory_space<vmem>>) attributes {dimension_semantics = [#tpu.dimension_semantics<parallel>], iteration_bounds = array<i64: 1>, scalar_prefetch = 0 : i64, scratch_operands = 0 : i64, tpu.core_type = #tpu.core_type<tc>, window_params = [{transform_indices = @transform_0, window_bounds = array<i64: 16, 32>}, {pipeline_mode = #tpu.pipeline_mode<synchronous>, transform_indices = @transform_1, window_bounds = array<i64: 32, 128>}, {pipeline_mode = #tpu.pipeline_mode<synchronous>, transform_indices = @transform_2, window_bounds = array<i64: 1, 128>}, {transform_indices = @transform_3, window_bounds = array<i64: 16, 128>}]} {
    %c0 = arith.constant 0 : index
    %c0_0 = arith.constant 0 : index
    %0 = vector.load %arg1[%c0, %c0_0] : memref<16x32xf32, #tpu.memory_space<vmem>>, vector<16x32xf32>
    %c0_1 = arith.constant 0 : index
    %c0_2 = arith.constant 0 : index
    %1 = vector.load %arg2[%c0_1, %c0_2] : memref<32x128xf32, #tpu.memory_space<vmem>>, vector<32x128xf32>
    %cst = arith.constant dense<0.000000e+00> : vector<16x128xf32>
    %2 = tpu.matmul %0, %1, %cst {dimension_numbers = #tpu.dot_dimension_numbers<[1], [0], [0], [1], [0, 0, 1, 1], [], []>} : vector<16x32xf32>, vector<32x128xf32>, vector<16x128xf32> -> vector<16x128xf32>
    %c0_3 = arith.constant 0 : index
    %c0_4 = arith.constant 0 : index
    %3 = vector.load %arg3[%c0_3, %c0_4] : memref<1x128xf32, #tpu.memory_space<vmem>>, vector<1x128xf32>
    %4 = vector.broadcast %3 : vector<1x128xf32> to vector<16x128xf32>
    %5 = arith.addf %2, %4 : vector<16x128xf32>
    %c0_5 = arith.constant 0 : index
    %c0_6 = arith.constant 0 : index
    %6 = vector.load %arg4[%c0_5, %c0_6] : memref<16x128xf32, #tpu.memory_space<vmem>>, vector<16x128xf32>
    tpu.vector_store %arg4[%c0_5, %c0_6], %5 {strides = array<i32>} : memref<16x128xf32, #tpu.memory_space<vmem>>, vector<16x128xf32>,
    return
  }
  func.func @transform_0(%arg0: i32) -> (i32, i32) {
    %c0_i32 = arith.constant 0 : i32
    %c0_i32_0 = arith.constant 0 : i32
    return %arg0, %c0_i32 : i32, i32
  }
  func.func @transform_1(%arg0: i32) -> (i32, i32) {
    %c0_i32 = arith.constant 0 : i32
    %c0_i32_0 = arith.constant 0 : i32
    %c0_i32_1 = arith.constant 0 : i32
    return %c0_i32, %c0_i32_0 : i32, i32
  }
  func.func @transform_2(%arg0: i32) -> (i32, i32) {
    %c0_i32 = arith.constant 0 : i32
    %c0_i32_0 = arith.constant 0 : i32
    %c0_i32_1 = arith.constant 0 : i32
    return %c0_i32, %c0_i32_0 : i32, i32
  }
  func.func @transform_3(%arg0: i32) -> (i32, i32) {
    %c0_i32 = arith.constant 0 : i32
    %c0_i32_0 = arith.constant 0 : i32
    return %arg0, %c0_i32 : i32, i32
  }
}

</mosaic_0001>

<llo_original>
// kernel: tpu_custom_call.1
$region0: #{tpu_custom_call.1}
  #allocation0 [shape = 'u32[]', space=smem, size = 0x4, offset = 0x4, fixed_abs, tag = 'smem constant byte address 0x4 - core index']
  #allocation1 [shape = 'u32[144,128]{1,0:T(1,128)}', space=vmem, size = 0x12000, scoped, tag = 'internal scratch']
  %s0 = inlined_call_operand.hbm [shape: f32[16,32], index: 0, kind: input, shape index: {}]
  %s1 = inlined_call_operand.hbm [shape: f32[32,128], index: 1, kind: input, shape index: {}]
  %s2 = inlined_call_operand.vmem [shape: f32[1,128], index: 2, kind: input, shape index: {}]
  %s3 = inlined_call_operand.hbm [shape: f32[16,128], index: 3, kind: output, shape index: {}]
  %s4 = sld [smem:[#allocation0]]
  $region30: #{tpu_custom_call.1} parent=0
    _
  %s6 = ssub.s32 1, %s4
  %s7 = scalar_select 0, %s6, %s4
  $region1: #{tpu_custom_call.1} parent=0
    #allocation2 [shape = 'u8[8192]{0}', space=vmem, size = 0x2000, scoped, tag = 'input window, operand 0, single buffered']
    #allocation3 [shape = 's32[1]{0}', space=sflag, size = 0x4, scoped, tag = 'scoped memory for tpu_custom_call.1']
    #allocation4 [shape = 's32[1]{0}', space=sflag, size = 0x4, scoped, tag = 'scoped memory for tpu_custom_call.1']
    #allocation5 [shape = 'u8[16384]{0}', space=vmem, size = 0x4000, scoped, tag = 'input window, operand 1, single buffered']
    #allocation6 [shape = 's32[1]{0}', space=sflag, size = 0x4, scoped, tag = 'scoped memory for tpu_custom_call.1']
    #allocation7 [shape = 'u8[8192]{0}', space=vmem, size = 0x2000, scoped, tag = 'output window, operand 0, single buffered']
    %8 = vsyncpa [#allocation3], 0
    %9 = vsyncpa [#allocation6], 0
    %10 = vsyncpa [#allocation4], 0
    // Predicated region
    $region2: #{tpu_custom_call.1} parent=1 // pred_check
      _
    $region3: #{tpu_custom_call.1} parent=1 // pred_check_branch
      %12 = sbr.rel (0) target = $region5
    $region4: #{tpu_custom_call.1} parent=1 // pred_region
      %s14 = ssub.s32 256, 256
      %15 = vsyncadd [#allocation3], %s14
      %s16 = sshll.u32 [#allocation2], 4
      %s17 = int_to_ptr.vmem [resolvable:$true] %s16
      %22 = dma.hbm_to_vmem [thread:$0]  %s0, 256, %s17, [#allocation3], 128, 128, 8
    $region5: #{tpu_custom_call.1} parent=1 // pred_fallthru
      _
    // Predicated region
    $region6: #{tpu_custom_call.1} parent=1 // pred_check
      _
    $region7: #{tpu_custom_call.1} parent=1 // pred_check_branch
      %24 = sbr.rel (0) target = $region9
    $region8: #{tpu_custom_call.1} parent=1 // pred_region
      %s26 = ssub.s32 512, 512
      %27 = vsyncadd [#allocation6], %s26
      %s28 = sshll.u32 [#allocation5], 4
      %s29 = int_to_ptr.vmem [resolvable:$true] %s28
      %34 = dma.hbm_to_vmem [thread:$0]  %s1, 512, %s29, [#allocation6], 128, 128, 8
    $region9: #{tpu_custom_call.1} parent=1 // pred_fallthru
      _
    // Predicated region
    $region10: #{tpu_custom_call.1} parent=1 // pred_check
      _
    $region11: #{tpu_custom_call.1} parent=1 // pred_check_branch
      %36 = sbr.rel (0) target = $region13
    $region12: #{tpu_custom_call.1} parent=1 // pred_region
      _
    $region13: #{tpu_custom_call.1} parent=1 // pred_fallthru
      _
    // Predicated region
    $region14: #{tpu_custom_call.1} parent=1 // pred_check
      _
    $region15: #{tpu_custom_call.1} parent=1 // pred_check_branch
      %38 = sbr.rel (0) target = $region17
    $region16: #{tpu_custom_call.1} parent=1 // pred_region
      %39 = dma.done [#allocation3], 256
    $region17: #{tpu_custom_call.1} parent=1 // pred_fallthru
      _
    // Predicated region
    $region18: #{tpu_custom_call.1} parent=1 // pred_check
      _
    $region19: #{tpu_custom_call.1} parent=1 // pred_check_branch
      %41 = sbr.rel (0) target = $region21
    $region20: #{tpu_custom_call.1} parent=1 // pred_region
      %42 = dma.done [#allocation6], 512
    $region21: #{tpu_custom_call.1} parent=1 // pred_fallthru
      _
    %v43 = vld [vmem:[#allocation2] sm:$0xff]
    %v44 = vld [vmem:[#allocation2 + $0x8] sm:$0xff]
    %v45 = vld [vmem:[#allocation5] sm:$0xff]
    %v46 = vld [vmem:[#allocation5 + $0x8] sm:$0xff]
    %v47 = vld [vmem:[#allocation5 + $0x10] sm:$0xff]
    %v48 = vld [vmem:[#allocation5 + $0x18] sm:$0xff]
    %v49 = vld [vmem:[%s2] sm:$0x1]
    %v51 = vlaneseq
    %v52 = vshrl.u32 %v51, 7
    %v53 = vsub.s32 0, %v52
    %v54 = vrot.slane %v49, %v53
    %vm56 = vcmask 261120
    %v58 = vsel %vm56, %v43, 0
    %v61 = vsel %vm56, %v44, 0
    %63 = vmatprep.subr.mxu0 0.0
    %64 = vmatpush1.msra.mxu0 %v45
    %65 = vmatprep.subr.mxu0 0.0
    %66 = vmatpush1.msra.mxu0 %v46
    %67 = vmatprep.subr.mxu0 0.0
    %68 = vmatpush1.msra.mxu0 %v47
    %69 = vmatprep.subr.mxu0 0.0
    %70 = vmatpush1.msra.mxu0 %v48
    %71 = vmatprep.subr.mxu0 0.0
    %72 = vmatpush1.msra.mxu0 0.0
    %73 = vmatprep.subr.mxu0 0.0
    %74 = vmatpush1.msra.mxu0 0.0
    %75 = vmatprep.subr.mxu0 0.0
    %76 = vmatpush1.msra.mxu0 0.0
    %77 = vmatprep.subr.mxu0 0.0
    %78 = vmatpush1.msra.mxu0 0.0
    %79 = vmatprep.subr.mxu0 0.0
    %80 = vmatpush1.msra.mxu0 0.0
    %81 = vmatprep.subr.mxu0 0.0
    %82 = vmatpush1.msra.mxu0 0.0
    %83 = vmatprep.subr.mxu0 0.0
    %84 = vmatpush1.msra.mxu0 0.0
    %85 = vmatprep.subr.mxu0 0.0
    %86 = vmatpush1.msra.mxu0 0.0
    %87 = vmatprep.subr.mxu0 0.0
    %88 = vmatpush1.msra.mxu0 0.0
    %89 = vmatprep.subr.mxu0 0.0
    %90 = vmatpush1.msra.mxu0 0.0
    %91 = vmatprep.subr.mxu0 0.0
    %92 = vmatpush1.msra.mxu0 0.0
    %93 = vmatprep.subr.mxu0 0.0
    %94 = vmatpush1.msra.mxu0 0.0
    %95 = vmatprep.subr.mxu0 0.0
    %96 = vmatpush1.msra.mxu0 0.0
    %97 = vmatprep.subr.mxu0 0.0
    %98 = vmatpush1.msra.mxu0 0.0
    %99 = vmatprep.subr.mxu0 0.0
    %100 = vmatpush1.msra.mxu0 0.0
    %101 = vmatprep.subr.mxu0 0.0
    %102 = vmatpush1.msra.mxu0 0.0
    %103 = vmatprep.subr.mxu0 0.0
    %104 = vmatpush1.msra.mxu0 0.0
    %105 = vmatprep.subr.mxu0 0.0
    %106 = vmatpush1.msra.mxu0 0.0
    %107 = vmatprep.subr.mxu0 0.0
    %108 = vmatpush1.msra.mxu0 0.0
    %109 = vmatprep.subr.mxu0 0.0
    %110 = vmatpush1.msra.mxu0 0.0
    %111 = vmatprep.subr.mxu0 0.0
    %112 = vmatpush1.msra.mxu0 0.0
    %113 = vmatprep.subr.mxu0 0.0
    %114 = vmatpush1.msra.mxu0 0.0
    %115 = vmatprep.subr.mxu0 0.0
    %116 = vmatpush1.msra.mxu0 0.0
    %117 = vmatprep.subr.mxu0 0.0
    %118 = vmatpush1.msra.mxu0 0.0
    %119 = vmatprep.subr.mxu0 0.0
    %120 = vmatpush1.msra.mxu0 0.0
    %121 = vmatprep.subr.mxu0 0.0
    %122 = vmatpush1.msra.mxu0 0.0
    %123 = vmatprep.subr.mxu0 0.0
    %124 = vmatpush1.msra.mxu0 0.0
    %125 = vmatprep.subr.mxu0 0.0
    %126 = vmatpush1.msra.mxu0 0.0
    %127 = vmatprep.mubr.f32.mxu0 0.0
    %128 = vmatmul.mubr.f32.gmra.mrb[0].mxu0 %v58
    %v129 = vpop.f32.mrb[0].mxu0
    %v130 = vadd.f32 %v54, %v129
    %v131 = vpop.f32.mrb[0].mxu0
    %132 = vmatprep.mubr.f32.mxu0 0.0
    %133 = vmatmul.mubr.f32.gmra.mrb[0].mxu0 %v61
    %v134 = vpop.f32.mrb[0].mxu0
    %v135 = vadd.f32 %v54, %v134
    %v136 = vpop.f32.mrb[0].mxu0
    %137 = vdwg.mxu0
    %138 = vst [vmem:[#allocation7] sm:$0xff] %v130
    %139 = vst [vmem:[#allocation7 + $0x8] sm:$0xff] %v135
    // Predicated region
    $region22: #{tpu_custom_call.1} parent=1 // pred_check
      _
    $region23: #{tpu_custom_call.1} parent=1 // pred_check_branch
      %141 = sbr.rel (0) target = $region25
    $region24: #{tpu_custom_call.1} parent=1 // pred_region
      %s143 = ssub.s32 256, 256
      %144 = vsyncadd [#allocation4], %s143
      %s145 = sshll.u32 [#allocation7], 4
      %s146 = int_to_ptr.vmem [resolvable:$true] %s145
      %151 = dma.vmem_to_hbm [thread:$0]  %s146, 256, %s3, [#allocation4], 128, 128, 8
    $region25: #{tpu_custom_call.1} parent=1 // pred_fallthru
      _
    // Predicated region
    $region26: #{tpu_custom_call.1} parent=1 // pred_check
      _
    $region27: #{tpu_custom_call.1} parent=1 // pred_check_branch
      %153 = sbr.rel (0) target = $region29
    $region28: #{tpu_custom_call.1} parent=1 // pred_region
      %154 = dma.done [#allocation4], 256
    $region29: #{tpu_custom_call.1} parent=1 // pred_fallthru
      _
    %155 = vsyncpa [#allocation3], 1
    %156 = vsyncpa [#allocation6], 1
    %157 = vsyncpa [#allocation4], 1

</llo_original>
